<compile_context>
chip_gen: v6e
topology: v6e:2x2x1
jax: 0.10.0
libtpu: 0.0.40
codegen_flags: <defaults>
</compile_context>

<pallas_src>
import jax
import jax.numpy as jnp
from jax.experimental import pallas as pl
from jax.experimental.pallas import tpu as pltpu


def _round_up(n: int, m: int) -> int:
    return ((n + m - 1) // m) * m


def _linear_sigmoid_kernel(x_ref, w_ref, b_ref, o_ref):
    # MXU matmul with f32 accumulation; bias add on VPU; logistic on EUP.
    z = jnp.dot(x_ref[...], w_ref[...], preferred_element_type=jnp.float32)
    z = z + b_ref[...]                       # (1, D_out) broadcasts over batch tile
    o_ref[...] = jax.nn.sigmoid(z).astype(o_ref.dtype)


def neural_network_forward(x, w, b, *, batch_tile: int = 8192):
    """x: (B, 21) f32, w: (21, 2) f32, b: (2,) f32 -> (B, 2) f32."""
    B, D_in = x.shape
    D_out = w.shape[1]
    b2d = b.reshape(1, D_out)                # keep bias 2D for TPU layout

    # --- batch-tile selection -------------------------------------------------
    # ~2 KiB/row of VMEM double-buffered (x + out, lane-padded to 128), so cap
    # tb at 8192 (~16 MiB) to stay inside the 32 MiB scoped limit requested
    # below on all of v5e / v6e / v7x.
    tb = min(batch_tile, 8192)
    tb = min(tb, _round_up(max(B, 1), 8))
    # Keep >= 2 grid steps for non-trivial batches so the "parallel" axis can
    # be sharded across both TensorCores on v7x.
    if B >= 16:
        tb = min(tb, _round_up(pl.cdiv(B, 2), 8))
    tb = _round_up(tb, 8)

    # Ragged batch handled by the boundary block (no jnp.pad extra HBM pass).
    grid = (pl.cdiv(B, tb),)

    cost = pl.CostEstimate(
        flops=2 * B * D_in * D_out,
        transcendentals=B * D_out,
        bytes_accessed=B * (D_in + D_out) * 4 + (D_in * D_out + D_out) * 4,
    )

    return pl.pallas_call(
        _linear_sigmoid_kernel,
        out_shape=jax.ShapeDtypeStruct((B, D_out), x.dtype),
        grid=grid,
        in_specs=[
            pl.BlockSpec((tb, D_in), lambda i: (i, 0)),      # streamed batch tiles
            pl.BlockSpec((D_in, D_out), lambda i: (0, 0)),   # W resident in VMEM
            pl.BlockSpec((1, D_out), lambda i: (0, 0)),      # b resident in VMEM
        ],
        out_specs=pl.BlockSpec((tb, D_out), lambda i: (i, 0)),
        compiler_params=pltpu.CompilerParams(
            dimension_semantics=("parallel",),   # v7x: shard batch over 2 TCs
            vmem_limit_bytes=32 << 20,           # v5e default is 16 MiB; raise it
        ),
        cost_estimate=cost,
    )(x, w, b2d)


def reference_forward(x, w, b):
    return jax.nn.sigmoid(x @ w + b)


if __name__ == "__main__":
    key = jax.random.PRNGKey(0)
    kx, kw, kb, kx2 = jax.random.split(key, 4)

    D_in, D_out = 21, 2

    # Deterministic PyTorch-style init: uniform(-1/sqrt(fan_in), +1/sqrt(fan_in)).
    bound = 1.0 / (D_in ** 0.5)
    w = jax.random.uniform(kw, (D_in, D_out), dtype=jnp.float32, minval=-bound, maxval=bound)
    b = jax.random.uniform(kb, (D_out,), dtype=jnp.float32, minval=-bound, maxval=bound)

    # Small-batch case (single grid step).
    B = 8
    x = jax.random.normal(kx, (B, D_in), dtype=jnp.float32)
    out = neural_network_forward(x, w, b)
    jax.block_until_ready(out)
    ref = reference_forward(x, w, b)
    assert out.shape == (B, D_out), out.shape
    assert jnp.allclose(out, ref, atol=1e-5, rtol=1e-5), "mismatch vs reference (B=8)"

    # Ragged multi-tile case: exercises batch tiling + boundary-block masking
    # (no jnp.pad / output slice).
    B2 = 37  # not a multiple of the tile
    x2 = jax.random.normal(kx2, (B2, D_in), dtype=jnp.float32)
    out2 = neural_network_forward(x2, w, b, batch_tile=16)
    jax.block_until_ready(out2)
    ref2 = reference_forward(x2, w, b)
    assert out2.shape == (B2, D_out), out2.shape
    assert jnp.allclose(out2, ref2, atol=1e-5, rtol=1e-5), "mismatch vs reference (B=37)"

    print("KERNEL_OK")
</pallas_src>

<mosaic_0001>
module attributes {stable_mosaic.version = 11 : i64} {
  func.func @_linear_sigmoid_kernel(%arg0: i32, %arg1: memref<8x21xf32, #tpu.memory_space<vmem>>, %arg2: memref<21x2xf32, #tpu.memory_space<vmem>>, %arg3: memref<1x2xf32, #tpu.memory_space<vmem>>, %arg4: memref<8x2xf32, #tpu.memory_space<vmem>>) attributes {dimension_semantics = [#tpu.dimension_semantics<parallel>], iteration_bounds = array<i64: 1>, scalar_prefetch = 0 : i64, scratch_operands = 0 : i64, tpu.core_type = #tpu.core_type<tc>, window_params = [{transform_indices = @transform_0, window_bounds = array<i64: 8, 21>}, {pipeline_mode = #tpu.pipeline_mode<synchronous>, transform_indices = @transform_1, window_bounds = array<i64: 21, 2>}, {pipeline_mode = #tpu.pipeline_mode<synchronous>, transform_indices = @transform_2, window_bounds = array<i64: 1, 2>}, {transform_indices = @transform_3, window_bounds = array<i64: 8, 2>}]} {
    %c0 = arith.constant 0 : index
    %c0_0 = arith.constant 0 : index
    %0 = vector.load %arg1[%c0, %c0_0] : memref<8x21xf32, #tpu.memory_space<vmem>>, vector<8x21xf32>
    %c0_1 = arith.constant 0 : index
    %c0_2 = arith.constant 0 : index
    %1 = vector.load %arg2[%c0_1, %c0_2] : memref<21x2xf32, #tpu.memory_space<vmem>>, vector<21x2xf32>
    %cst = arith.constant dense<0.000000e+00> : vector<8x2xf32>
    %2 = tpu.matmul %0, %1, %cst {dimension_numbers = #tpu.dot_dimension_numbers<[1], [0], [0], [1], [0, 0, 1, 1], [], []>} : vector<8x21xf32>, vector<21x2xf32>, vector<8x2xf32> -> vector<8x2xf32>
    %c0_3 = arith.constant 0 : index
    %c0_4 = arith.constant 0 : index
    %3 = vector.load %arg3[%c0_3, %c0_4] : memref<1x2xf32, #tpu.memory_space<vmem>>, vector<1x2xf32>
    %4 = vector.broadcast %3 : vector<1x2xf32> to vector<8x2xf32>
    %5 = arith.addf %2, %4 : vector<8x2xf32>
    %6 = arith.negf %5 : vector<8x2xf32>
    %7 = math.exp %6 : vector<8x2xf32>
    %cst_5 = arith.constant 1.000000e+00 : f32
    %8 = vector.broadcast %cst_5 : f32 to vector<8x2xf32>
    %9 = arith.addf %8, %7 : vector<8x2xf32>
    %10 = arith.divf %8, %9 : vector<8x2xf32>
    %c0_6 = arith.constant 0 : index
    %c0_7 = arith.constant 0 : index
    %11 = vector.load %arg4[%c0_6, %c0_7] : memref<8x2xf32, #tpu.memory_space<vmem>>, vector<8x2xf32>
    tpu.vector_store %arg4[%c0_6, %c0_7], %10 {strides = array<i32>} : memref<8x2xf32, #tpu.memory_space<vmem>>, vector<8x2xf32>,
    return
  }
  func.func @transform_0(%arg0: i32) -> (i32, i32) {
    %c0_i32 = arith.constant 0 : i32
    %c0_i32_0 = arith.constant 0 : i32
    return %arg0, %c0_i32 : i32, i32
  }
  func.func @transform_1(%arg0: i32) -> (i32, i32) {
    %c0_i32 = arith.constant 0 : i32
    %c0_i32_0 = arith.constant 0 : i32
    %c0_i32_1 = arith.constant 0 : i32
    return %c0_i32, %c0_i32_0 : i32, i32
  }
  func.func @transform_2(%arg0: i32) -> (i32, i32) {
    %c0_i32 = arith.constant 0 : i32
    %c0_i32_0 = arith.constant 0 : i32
    %c0_i32_1 = arith.constant 0 : i32
    return %c0_i32, %c0_i32_0 : i32, i32
  }
  func.func @transform_3(%arg0: i32) -> (i32, i32) {
    %c0_i32 = arith.constant 0 : i32
    %c0_i32_0 = arith.constant 0 : i32
    return %arg0, %c0_i32 : i32, i32
  }
}

</mosaic_0001>

<llo_original>
// kernel: tpu_custom_call.1
$region0: #{tpu_custom_call.1}
  #allocation0 [shape = 'u32[]', space=smem, size = 0x4, offset = 0x4, fixed_abs, tag = 'smem constant byte address 0x4 - core index']
  #allocation1 [shape = 'u32[144,128]{1,0:T(1,128)}', space=vmem, size = 0x12000, scoped, tag = 'internal scratch']
  %s0 = inlined_call_operand.vmem [shape: f32[8,21], index: 0, kind: input, shape index: {}]
  %s1 = inlined_call_operand.vmem [shape: f32[21,2], index: 1, kind: input, shape index: {}]
  %s2 = inlined_call_operand.vmem [shape: f32[1,2], index: 2, kind: input, shape index: {}]
  %s3 = inlined_call_operand.vmem [shape: f32[8,2], index: 3, kind: output, shape index: {}]
  %s4 = sld [smem:[#allocation0]]
  $region22: #{tpu_custom_call.1} parent=0
    _
  %s6 = ssub.s32 1, %s4
  %s7 = scalar_select 0, %s6, %s4
  // Predicated region
  $region2: #{tpu_custom_call.1} parent=0 // pred_check
    _
  $region3: #{tpu_custom_call.1} parent=0 // pred_check_branch
    %9 = sbr.rel (0) target = $region5
  $region4: #{tpu_custom_call.1} parent=0 // pred_region
    _
  $region5: #{tpu_custom_call.1} parent=0 // pred_fallthru
    _
  // Predicated region
  $region6: #{tpu_custom_call.1} parent=0 // pred_check
    _
  $region7: #{tpu_custom_call.1} parent=0 // pred_check_branch
    %11 = sbr.rel (0) target = $region9
  $region8: #{tpu_custom_call.1} parent=0 // pred_region
    _
  $region9: #{tpu_custom_call.1} parent=0 // pred_fallthru
    _
  // Predicated region
  $region10: #{tpu_custom_call.1} parent=0 // pred_check
    _
  $region11: #{tpu_custom_call.1} parent=0 // pred_check_branch
    %13 = sbr.rel (0) target = $region13
  $region12: #{tpu_custom_call.1} parent=0 // pred_region
    _
  $region13: #{tpu_custom_call.1} parent=0 // pred_fallthru
    _
  %v14 = vld [vmem:[%s0] sm:$0xff]
  %v15 = vld [vmem:[%s1] sm:$0xff]
  %v16 = vld [vmem:[%s1 + $0x8] sm:$0xff]
  %v17 = vld [vmem:[%s1 + $0x10] sm:$0x1f]
  %v18 = vld [vmem:[%s2] sm:$0x1]
  %v20 = vlaneseq
  %v21 = vshrl.u32 %v20, 7
  %v22 = vsub.s32 0, %v21
  %v23 = vrot.slane %v18, %v22
  %vm25 = vcmask 171008
  %v27 = vsel %vm25, %v14, 0
  %vm29 = vcmask 1044480
  %v31 = vsel %vm29, %v17, 0
  %33 = vmatprep.subr.mxu0 0.0
  %34 = vmatpush1.msra.mxu0 0.0
  %35 = vmatprep.subr.mxu0 0.0
  %36 = vmatpush1.msra.mxu0 0.0
  %37 = vmatprep.subr.mxu0 0.0
  %38 = vmatpush1.msra.mxu0 0.0
  %39 = vmatprep.subr.mxu0 0.0
  %40 = vmatpush1.msra.mxu0 0.0
  %41 = vmatprep.subr.mxu0 0.0
  %42 = vmatpush1.msra.mxu0 0.0
  %43 = vmatprep.subr.mxu0 0.0
  %44 = vmatpush1.msra.mxu0 0.0
  %45 = vmatprep.subr.mxu0 0.0
  %46 = vmatpush1.msra.mxu0 0.0
  %47 = vmatprep.subr.mxu0 0.0
  %48 = vmatpush1.msra.mxu0 0.0
  %49 = vmatprep.subr.mxu0 0.0
  %50 = vmatpush1.msra.mxu0 0.0
  %51 = vmatprep.subr.mxu0 0.0
  %52 = vmatpush1.msra.mxu0 0.0
  %53 = vmatprep.subr.mxu0 0.0
  %54 = vmatpush1.msra.mxu0 0.0
  %55 = vmatprep.subr.mxu0 0.0
  %56 = vmatpush1.msra.mxu0 0.0
  %57 = vmatprep.subr.mxu0 0.0
  %58 = vmatpush1.msra.mxu0 0.0
  %59 = vmatprep.subr.mxu0 0.0
  %60 = vmatpush1.msra.mxu0 %v31
  %61 = vmatprep.subr.mxu0 0.0
  %62 = vmatpush1.msra.mxu0 %v16
  %63 = vmatprep.subr.mxu0 0.0
  %64 = vmatpush1.msra.mxu0 %v15
  %65 = vmatprep.subr.mxu0 0.0
  %66 = vmatpush2.msra.mxu0 0.0
  %67 = vmatprep.subr.mxu0 0.0
  %68 = vmatpush2.msra.mxu0 0.0
  %69 = vmatprep.subr.mxu0 0.0
  %70 = vmatpush2.msra.mxu0 0.0
  %71 = vmatprep.subr.mxu0 0.0
  %72 = vmatpush2.msra.mxu0 0.0
  %73 = vmatprep.subr.mxu0 0.0
  %74 = vmatpush2.msra.mxu0 0.0
  %75 = vmatprep.subr.mxu0 0.0
  %76 = vmatpush2.msra.mxu0 0.0
  %77 = vmatprep.subr.mxu0 0.0
  %78 = vmatpush2.msra.mxu0 0.0
  %79 = vmatprep.subr.mxu0 0.0
  %80 = vmatpush2.msra.mxu0 0.0
  %81 = vmatprep.subr.mxu0 0.0
  %82 = vmatpush2.msra.mxu0 0.0
  %83 = vmatprep.subr.mxu0 0.0
  %84 = vmatpush2.msra.mxu0 0.0
  %85 = vmatprep.subr.mxu0 0.0
  %86 = vmatpush2.msra.mxu0 0.0
  %87 = vmatprep.subr.mxu0 0.0
  %88 = vmatpush2.msra.mxu0 0.0
  %89 = vmatprep.subr.mxu0 0.0
  %90 = vmatpush2.msra.mxu0 0.0
  %91 = vmatprep.subr.mxu0 0.0
  %92 = vmatpush2.msra.mxu0 0.0
  %93 = vmatprep.subr.mxu0 0.0
  %94 = vmatpush2.msra.mxu0 0.0
  %95 = vmatprep.subr.mxu0 0.0
  %96 = vmatpush2.msra.mxu0 0.0
  %97 = vmatprep.mubr.f32.mxu0 0.0
  %98 = vmatmul.mubr.f32.gmra.mxu0 %v27
  %v99 = vpop.f32.mrf.mxu0
  %v100 = vadd.f32 %v23, %v99
  %v101 = vpop.f32.mrf.mxu0
  %102 = vdwg.mxu0
  %v103 = vxor.u32 %v100, 2147483648
  %v104 = vmul.f32 %v103, 1.442695
  %v105 = vpow.pop %v104
  %v106 = vadd.f32 %v105, 1.0
  %v107 = vrcp.pop %v106
  %v108 = vmul.f32 1.0, %v107
  %vm109 = vcmask 15360
  %110 = vst.msk [vmem:[%s3] sm:$0xff] %vm109, %v108
  // Predicated region
  $region14: #{tpu_custom_call.1} parent=0 // pred_check
    _
  $region15: #{tpu_custom_call.1} parent=0 // pred_check_branch
    %112 = sbr.rel (0) target = $region17
  $region16: #{tpu_custom_call.1} parent=0 // pred_region
    _
  $region17: #{tpu_custom_call.1} parent=0 // pred_fallthru
    _
  // Predicated region
  $region18: #{tpu_custom_call.1} parent=0 // pred_check
    _
  $region19: #{tpu_custom_call.1} parent=0 // pred_check_branch
    %114 = sbr.rel (0) target = $region21
  $region20: #{tpu_custom_call.1} parent=0 // pred_region
    _
  $region21: #{tpu_custom_call.1} parent=0 // pred_fallthru
    _

</llo_original>
